<compile_context>
chip_gen: v5e
topology: v5e:2x2
jax: 0.10.0
libtpu: 0.0.40
codegen_flags: <defaults>
</compile_context>

<pallas_src>
import jax
import jax.numpy as jnp
from jax.experimental import pallas as pl
from jax.experimental.pallas import tpu as pltpu

# ---- model dimensions ----
D0, H1, H2, DZ = 32, 64, 32, 16
B = 256          # global batch for the demo

# ---- packed-parameter slab layout: (P_ROWS, 128) f32, weights stored (out, in) ----
P_COLS = 128
MAX_OUT = 64
R_W1 = 0                    # W1^T  (H1, D0)   rows  0..63
R_W2 = R_W1 + H1            # W2^T  (H2, H1)   rows 64..95
R_WML = R_W2 + H2           # WML^T (2DZ, H2)  rows 96..127  (fused mu|logvar)
R_WP1 = R_WML + 2 * DZ      # WP1^T (H2, DZ)
R_WP2 = R_WP1 + H2          # WP2^T (H1, H2)
R_WP3 = R_WP2 + H1          # WP3^T (D0, H1)
R_B = R_WP3 + D0            # bias block (MAX_OUT rows x 6 columns)
P_ROWS = R_B + MAX_OUT      # 320 rows total (multiple of 8)
# bias column indices inside the bias block
C_B1, C_B2, C_BML, C_BP1, C_BP2, C_BP3 = 0, 1, 2, 3, 4, 5


def vae_kernel(xt_ref, epst_ref, p_ref, recont_ref, loss_ref):
    xt = xt_ref[...]        # (D0, TB)  batch on lanes
    epst = epst_ref[...]    # (DZ, TB)

    def sigmoid(v):
        # single EUP tanh instead of exp + full-precision divide
        return 0.5 * jnp.tanh(0.5 * v) + 0.5

    def layer(w_row, n_out, n_in, b_col, a, act=True):
        # static slices out of the resident parameter slab: free
        w = p_ref[pl.ds(w_row, n_out), pl.ds(0, n_in)]      # (out, in)
        b = p_ref[pl.ds(R_B, n_out), pl.ds(b_col, 1)]       # (out, 1) -> lane bcast
        v = jnp.dot(w, a, preferred_element_type=jnp.float32) + b
        return sigmoid(v) if act else v

    # ---- encoder Q ----
    h1 = layer(R_W1, H1, D0, C_B1, xt)                      # (H1, TB)
    h2 = layer(R_W2, H2, H1, C_B2, h1)                      # (H2, TB)

    # ---- fused latent heads (mu | logvar) ----
    zml = layer(R_WML, 2 * DZ, H2, C_BML, h2, act=False)    # (2DZ, TB)
    z_mu = zml[:DZ, :]
    z_lv = zml[DZ:, :]

    # ---- reparameterization: compute std once, reuse s*s for the KL term ----
    s = jnp.exp(0.5 * z_lv)                                  # (DZ, TB)
    z = z_mu + s * epst

    # ---- decoder P ----
    d1 = layer(R_WP1, H2, DZ, C_BP1, z)                      # (H2, TB)
    d2 = layer(R_WP2, H1, H2, C_BP2, d1)                     # (H1, TB)
    recon = layer(R_WP3, D0, H1, C_BP3, d2)                  # (D0, TB)
    # torch.clamp(recon, 0, 1) is a no-op on sigmoid outputs -> omitted
    recont_ref[...] = recon                                  # lane-dense store

    # ---- per-sample loss as a lane-dense (1, TB) row ----
    # BCE term with PyTorch's log clamp at -100.
    log_r = jnp.maximum(jnp.log(recon), -100.0)
    log_1mr = jnp.maximum(jnp.log(1.0 - recon), -100.0)
    bce = -jnp.sum(xt * log_r + (1.0 - xt) * log_1mr, axis=0, keepdims=True)
    kl = 0.5 * jnp.sum(s * s + z_mu * z_mu - 1.0 - z_lv, axis=0, keepdims=True)
    loss_ref[...] = bce + kl                                 # (1, TB)


def pack_params(p):
    """Pack all weights/biases into one (P_ROWS, 128) f32 slab (single DMA).

    Weights stored transposed (out, in); biases stored as columns of the bias
    block so they broadcast along the lane (batch) axis in the kernel.
    """
    slab = jnp.zeros((P_ROWS, P_COLS), jnp.float32)

    def put_w(s, row, w):              # w is (in, out) -> store w.T = (out, in)
        wt = w.T
        return s.at[row:row + wt.shape[0], :wt.shape[1]].set(wt)

    def put_b(s, col, b):              # b is (1, out) -> column of length out
        return s.at[R_B:R_B + b.shape[1], col].set(b[0])

    wml = jnp.concatenate([p["wmu"], p["wlv"]], axis=1)      # (H2, 2DZ)
    bml = jnp.concatenate([p["bmu"], p["blv"]], axis=1)      # (1, 2DZ)

    slab = put_w(slab, R_W1, p["w1"])
    slab = put_w(slab, R_W2, p["w2"])
    slab = put_w(slab, R_WML, wml)
    slab = put_w(slab, R_WP1, p["wp1"])
    slab = put_w(slab, R_WP2, p["wp2"])
    slab = put_w(slab, R_WP3, p["wp3"])
    slab = put_b(slab, C_B1, p["b1"])
    slab = put_b(slab, C_B2, p["b2"])
    slab = put_b(slab, C_BML, bml)
    slab = put_b(slab, C_BP1, p["bp1"])
    slab = put_b(slab, C_BP2, p["bp2"])
    slab = put_b(slab, C_BP3, p["bp3"])
    return slab


def init_params(key):
    """Deterministic Glorot-uniform-ish init; weights (in, out), biases (1, out)."""
    dims = [
        ("w1", (D0, H1)), ("w2", (H1, H2)),
        ("wmu", (H2, DZ)), ("wlv", (H2, DZ)),
        ("wp1", (DZ, H2)), ("wp2", (H2, H1)), ("wp3", (H1, D0)),
    ]
    params = {}
    for name, shape in dims:
        key, sub = jax.random.split(key)
        lim = (6.0 / (shape[0] + shape[1])) ** 0.5
        params[name] = jax.random.uniform(sub, shape, jnp.float32, -lim, lim)
        params["b" + name[1:]] = jnp.zeros((1, shape[1]), jnp.float32)
    return params


def _choose_tb(bg: int) -> int:
    """Batch tile: ~2 large lane-dense tiles (v7x megacore), capped at 1024 rows."""
    tb = pl.next_power_of_2(max(1, pl.cdiv(bg, 2)))
    return int(max(128, min(1024, tb)))


@jax.jit
def vae_forward(x, eps, params):
    bg = x.shape[0]
    tb = _choose_tb(bg)
    nb = pl.cdiv(bg, tb)
    bp = nb * tb

    # batch on the lane axis: feed transposed activations
    xt = x.T                                   # (D0, bg)
    epst = eps.T                               # (DZ, bg)
    if bp != bg:                               # pad lanes to whole batch tiles
        xt = jnp.pad(xt, ((0, 0), (0, bp - bg)))
        epst = jnp.pad(epst, ((0, 0), (0, bp - bg)))

    packed = pack_params(params)

    recon_t, loss_row = pl.pallas_call(
        vae_kernel,
        out_shape=(
            jax.ShapeDtypeStruct((D0, bp), jnp.float32),
            jax.ShapeDtypeStruct((1, bp), jnp.float32),
        ),
        grid_spec=pltpu.PrefetchScalarGridSpec(
            num_scalar_prefetch=0,
            grid=(nb,),
            in_specs=[
                pl.BlockSpec((D0, tb), lambda i: (0, i)),          # x^T tile
                pl.BlockSpec((DZ, tb), lambda i: (0, i)),          # eps^T tile
                pl.BlockSpec((P_ROWS, P_COLS), lambda i: (0, 0)),  # params, resident
            ],
            out_specs=[
                pl.BlockSpec((D0, tb), lambda i: (0, i)),          # recon^T tile
                pl.BlockSpec((1, tb), lambda i: (0, i)),           # loss row
            ],
        ),
        compiler_params=pltpu.CompilerParams(
            dimension_semantics=("parallel",)),
    )(xt, epst, packed)

    recon = recon_t[:, :bg].T                       # back to (B, D0)
    loss = jnp.sum(loss_row[0, :bg]) / bg           # TRUE batch; padded lanes dropped
    return recon, loss


def vae_forward_ref(x, eps, p):
    """Pure-JAX reference for correctness check (mirrors the PyTorch forward)."""
    sig = lambda v: 1.0 / (1.0 + jnp.exp(-v))
    h = sig(sig(x @ p["w1"] + p["b1"]) @ p["w2"] + p["b2"])
    mu = h @ p["wmu"] + p["bmu"]
    lv = h @ p["wlv"] + p["blv"]
    z = mu + jnp.exp(lv * 0.5) * eps
    d = sig(sig(sig(z @ p["wp1"] + p["bp1"]) @ p["wp2"] + p["bp2"]) @ p["wp3"] + p["bp3"])
    recon = jnp.clip(d, 0.0, 1.0)
    log_r = jnp.maximum(jnp.log(recon), -100.0)
    log_1mr = jnp.maximum(jnp.log(1.0 - recon), -100.0)
    recon_loss = -jnp.sum(x * log_r + (1.0 - x) * log_1mr) / x.shape[0]
    kl = jnp.mean(jnp.sum(jnp.exp(lv) + mu * mu - 1.0 - lv, axis=1) * 0.5)
    return recon, recon_loss + kl


if __name__ == "__main__":
    key = jax.random.PRNGKey(0)
    kx, keps, kparams = jax.random.split(key, 3)

    # BCE target must lie in [0, 1] (same constraint as the PyTorch module).
    x = jax.random.uniform(kx, (B, D0), jnp.float32, 0.0, 1.0)
    # eps corresponds to torch.randn in sample_z; passed in for determinism.
    eps = jax.random.normal(keps, (B, DZ), jnp.float32)
    params = init_params(kparams)

    recon, loss = vae_forward(x, eps, params)
    jax.block_until_ready((recon, loss))

    recon_ref, loss_ref_val = vae_forward_ref(x, eps, params)
    assert recon.shape == (B, D0) and recon.dtype == jnp.float32
    assert jnp.allclose(recon, recon_ref, atol=1e-4, rtol=1e-4)
    assert jnp.allclose(loss, loss_ref_val, atol=1e-2, rtol=1e-3)

    print("KERNEL_OK")
</pallas_src>

<mosaic_0001>
module attributes {stable_mosaic.version = 11 : i64} {
  func.func @vae_kernel(%arg0: i32, %arg1: memref<32x128xf32, #tpu.memory_space<vmem>>, %arg2: memref<16x128xf32, #tpu.memory_space<vmem>>, %arg3: memref<320x128xf32, #tpu.memory_space<vmem>>, %arg4: memref<32x128xf32, #tpu.memory_space<vmem>>, %arg5: memref<1x128xf32, #tpu.memory_space<vmem>>) attributes {dimension_semantics = [#tpu.dimension_semantics<parallel>], iteration_bounds = array<i64: 2>, scalar_prefetch = 0 : i64, scratch_operands = 0 : i64, tpu.core_type = #tpu.core_type<tc>, window_params = [{transform_indices = @transform_0, window_bounds = array<i64: 32, 128>}, {transform_indices = @transform_1, window_bounds = array<i64: 16, 128>}, {pipeline_mode = #tpu.pipeline_mode<synchronous>, transform_indices = @transform_2, window_bounds = array<i64: 320, 128>}, {transform_indices = @transform_3, window_bounds = array<i64: 32, 128>}, {transform_indices = @transform_4, window_bounds = array<i64: 1, 128>}]} {
    %c0 = arith.constant 0 : index
    %c0_0 = arith.constant 0 : index
    %0 = vector.load %arg1[%c0, %c0_0] : memref<32x128xf32, #tpu.memory_space<vmem>>, vector<32x128xf32>
    %c0_1 = arith.constant 0 : index
    %c0_2 = arith.constant 0 : index
    %1 = vector.load %arg2[%c0_1, %c0_2] : memref<16x128xf32, #tpu.memory_space<vmem>>, vector<16x128xf32>
    %c0_3 = arith.constant 0 : index
    %c0_4 = arith.constant 0 : index
    %2 = vector.load %arg3[%c0_3, %c0_4] : memref<320x128xf32, #tpu.memory_space<vmem>>, vector<64x32xf32>
    %c256 = arith.constant 256 : index
    %c0_5 = arith.constant 0 : index
    %3 = vector.load %arg3[%c256, %c0_5] : memref<320x128xf32, #tpu.memory_space<vmem>>, vector<64x1xf32>
    %cst = arith.constant dense<0.000000e+00> : vector<64x128xf32>
    %4 = tpu.matmul %2, %0, %cst {dimension_numbers = #tpu.dot_dimension_numbers<[1], [0], [0], [1], [0, 0, 1, 1], [], []>} : vector<64x32xf32>, vector<32x128xf32>, vector<64x128xf32> -> vector<64x128xf32>
    %5 = vector.broadcast %3 : vector<64x1xf32> to vector<64x128xf32>
    %6 = arith.addf %4, %5 : vector<64x128xf32>
    %cst_6 = arith.constant 5.000000e-01 : f32
    %7 = vector.broadcast %cst_6 : f32 to vector<64x128xf32>
    %8 = arith.mulf %7, %6 : vector<64x128xf32>
    %9 = math.tanh %8 : vector<64x128xf32>
    %cst_7 = arith.constant 5.000000e-01 : f32
    %10 = vector.broadcast %cst_7 : f32 to vector<64x128xf32>
    %11 = arith.mulf %10, %9 : vector<64x128xf32>
    %cst_8 = arith.constant 5.000000e-01 : f32
    %12 = vector.broadcast %cst_8 : f32 to vector<64x128xf32>
    %13 = arith.addf %11, %12 : vector<64x128xf32>
    %c64 = arith.constant 64 : index
    %c0_9 = arith.constant 0 : index
    %14 = vector.load %arg3[%c64, %c0_9] : memref<320x128xf32, #tpu.memory_space<vmem>>, vector<32x64xf32>
    %c256_10 = arith.constant 256 : index
    %c1 = arith.constant 1 : index
    %15 = vector.load %arg3[%c256_10, %c1] : memref<320x128xf32, #tpu.memory_space<vmem>>, vector<32x1xf32>
    %cst_11 = arith.constant dense<0.000000e+00> : vector<32x128xf32>
    %16 = tpu.matmul %14, %13, %cst_11 {dimension_numbers = #tpu.dot_dimension_numbers<[1], [0], [0], [1], [0, 0, 1, 1], [], []>} : vector<32x64xf32>, vector<64x128xf32>, vector<32x128xf32> -> vector<32x128xf32>
    %17 = vector.broadcast %15 : vector<32x1xf32> to vector<32x128xf32>
    %18 = arith.addf %16, %17 : vector<32x128xf32>
    %cst_12 = arith.constant 5.000000e-01 : f32
    %19 = vector.broadcast %cst_12 : f32 to vector<32x128xf32>
    %20 = arith.mulf %19, %18 : vector<32x128xf32>
    %21 = math.tanh %20 : vector<32x128xf32>
    %cst_13 = arith.constant 5.000000e-01 : f32
    %22 = vector.broadcast %cst_13 : f32 to vector<32x128xf32>
    %23 = arith.mulf %22, %21 : vector<32x128xf32>
    %cst_14 = arith.constant 5.000000e-01 : f32
    %24 = vector.broadcast %cst_14 : f32 to vector<32x128xf32>
    %25 = arith.addf %23, %24 : vector<32x128xf32>
    %c96 = arith.constant 96 : index
    %c0_15 = arith.constant 0 : index
    %26 = vector.load %arg3[%c96, %c0_15] : memref<320x128xf32, #tpu.memory_space<vmem>>, vector<32x32xf32>
    %c256_16 = arith.constant 256 : index
    %c2 = arith.constant 2 : index
    %27 = vector.load %arg3[%c256_16, %c2] : memref<320x128xf32, #tpu.memory_space<vmem>>, vector<32x1xf32>
    %cst_17 = arith.constant dense<0.000000e+00> : vector<32x128xf32>
    %28 = tpu.matmul %26, %25, %cst_17 {dimension_numbers = #tpu.dot_dimension_numbers<[1], [0], [0], [1], [0, 0, 1, 1], [], []>} : vector<32x32xf32>, vector<32x128xf32>, vector<32x128xf32> -> vector<32x128xf32>
    %29 = vector.broadcast %27 : vector<32x1xf32> to vector<32x128xf32>
    %30 = arith.addf %28, %29 : vector<32x128xf32>
    %31 = vector.extract_strided_slice %30 {offsets = [0, 0], sizes = [16, 128], strides = [1, 1]} : vector<32x128xf32> to vector<16x128xf32>
    %32 = vector.extract_strided_slice %30 {offsets = [16, 0], sizes = [16, 128], strides = [1, 1]} : vector<32x128xf32> to vector<16x128xf32>
    %cst_18 = arith.constant 5.000000e-01 : f32
    %33 = vector.broadcast %cst_18 : f32 to vector<16x128xf32>
    %34 = arith.mulf %33, %32 : vector<16x128xf32>
    %35 = math.exp %34 : vector<16x128xf32>
    %36 = arith.mulf %35, %1 : vector<16x128xf32>
    %37 = arith.addf %31, %36 : vector<16x128xf32>
    %c128 = arith.constant 128 : index
    %c0_19 = arith.constant 0 : index
    %38 = vector.load %arg3[%c128, %c0_19] : memref<320x128xf32, #tpu.memory_space<vmem>>, vector<32x16xf32>
    %c256_20 = arith.constant 256 : index
    %c3 = arith.constant 3 : index
    %39 = vector.load %arg3[%c256_20, %c3] : memref<320x128xf32, #tpu.memory_space<vmem>>, vector<32x1xf32>
    %cst_21 = arith.constant dense<0.000000e+00> : vector<32x128xf32>
    %40 = tpu.matmul %38, %37, %cst_21 {dimension_numbers = #tpu.dot_dimension_numbers<[1], [0], [0], [1], [0, 0, 1, 1], [], []>} : vector<32x16xf32>, vector<16x128xf32>, vector<32x128xf32> -> vector<32x128xf32>
    %41 = vector.broadcast %39 : vector<32x1xf32> to vector<32x128xf32>
    %42 = arith.addf %40, %41 : vector<32x128xf32>
    %cst_22 = arith.constant 5.000000e-01 : f32
    %43 = vector.broadcast %cst_22 : f32 to vector<32x128xf32>
    %44 = arith.mulf %43, %42 : vector<32x128xf32>
    %45 = math.tanh %44 : vector<32x128xf32>
    %cst_23 = arith.constant 5.000000e-01 : f32
    %46 = vector.broadcast %cst_23 : f32 to vector<32x128xf32>
    %47 = arith.mulf %46, %45 : vector<32x128xf32>
    %cst_24 = arith.constant 5.000000e-01 : f32
    %48 = vector.broadcast %cst_24 : f32 to vector<32x128xf32>
    %49 = arith.addf %47, %48 : vector<32x128xf32>
    %c160 = arith.constant 160 : index
    %c0_25 = arith.constant 0 : index
    %50 = vector.load %arg3[%c160, %c0_25] : memref<320x128xf32, #tpu.memory_space<vmem>>, vector<64x32xf32>
    %c256_26 = arith.constant 256 : index
    %c4 = arith.constant 4 : index
    %51 = vector.load %arg3[%c256_26, %c4] : memref<320x128xf32, #tpu.memory_space<vmem>>, vector<64x1xf32>
    %cst_27 = arith.constant dense<0.000000e+00> : vector<64x128xf32>
    %52 = tpu.matmul %50, %49, %cst_27 {dimension_numbers = #tpu.dot_dimension_numbers<[1], [0], [0], [1], [0, 0, 1, 1], [], []>} : vector<64x32xf32>, vector<32x128xf32>, vector<64x128xf32> -> vector<64x128xf32>
    %53 = vector.broadcast %51 : vector<64x1xf32> to vector<64x128xf32>
    %54 = arith.addf %52, %53 : vector<64x128xf32>
    %cst_28 = arith.constant 5.000000e-01 : f32
    %55 = vector.broadcast %cst_28 : f32 to vector<64x128xf32>
    %56 = arith.mulf %55, %54 : vector<64x128xf32>
    %57 = math.tanh %56 : vector<64x128xf32>
    %cst_29 = arith.constant 5.000000e-01 : f32
    %58 = vector.broadcast %cst_29 : f32 to vector<64x128xf32>
    %59 = arith.mulf %58, %57 : vector<64x128xf32>
    %cst_30 = arith.constant 5.000000e-01 : f32
    %60 = vector.broadcast %cst_30 : f32 to vector<64x128xf32>
    %61 = arith.addf %59, %60 : vector<64x128xf32>
    %c224 = arith.constant 224 : index
    %c0_31 = arith.constant 0 : index
    %62 = vector.load %arg3[%c224, %c0_31] : memref<320x128xf32, #tpu.memory_space<vmem>>, vector<32x64xf32>
    %c256_32 = arith.constant 256 : index
    %c5 = arith.constant 5 : index
    %63 = vector.load %arg3[%c256_32, %c5] : memref<320x128xf32, #tpu.memory_space<vmem>>, vector<32x1xf32>
    %cst_33 = arith.constant dense<0.000000e+00> : vector<32x128xf32>
    %64 = tpu.matmul %62, %61, %cst_33 {dimension_numbers = #tpu.dot_dimension_numbers<[1], [0], [0], [1], [0, 0, 1, 1], [], []>} : vector<32x64xf32>, vector<64x128xf32>, vector<32x128xf32> -> vector<32x128xf32>
    %65 = vector.broadcast %63 : vector<32x1xf32> to vector<32x128xf32>
    %66 = arith.addf %64, %65 : vector<32x128xf32>
    %cst_34 = arith.constant 5.000000e-01 : f32
    %67 = vector.broadcast %cst_34 : f32 to vector<32x128xf32>
    %68 = arith.mulf %67, %66 : vector<32x128xf32>
    %69 = math.tanh %68 : vector<32x128xf32>
    %cst_35 = arith.constant 5.000000e-01 : f32
    %70 = vector.broadcast %cst_35 : f32 to vector<32x128xf32>
    %71 = arith.mulf %70, %69 : vector<32x128xf32>
    %cst_36 = arith.constant 5.000000e-01 : f32
    %72 = vector.broadcast %cst_36 : f32 to vector<32x128xf32>
    %73 = arith.addf %71, %72 : vector<32x128xf32>
    %c0_37 = arith.constant 0 : index
    %c0_38 = arith.constant 0 : index
    %74 = vector.load %arg4[%c0_37, %c0_38] : memref<32x128xf32, #tpu.memory_space<vmem>>, vector<32x128xf32>
    tpu.vector_store %arg4[%c0_37, %c0_38], %73 {strides = array<i32>} : memref<32x128xf32, #tpu.memory_space<vmem>>, vector<32x128xf32>,
    %75 = math.log %73 : vector<32x128xf32>
    %cst_39 = arith.constant -1.000000e+02 : f32
    %76 = vector.broadcast %cst_39 : f32 to vector<32x128xf32>
    %77 = arith.maximumf %75, %76 : vector<32x128xf32>
    %cst_40 = arith.constant 1.000000e+00 : f32
    %78 = vector.broadcast %cst_40 : f32 to vector<32x128xf32>
    %79 = arith.subf %78, %73 : vector<32x128xf32>
    %80 = math.log %79 : vector<32x128xf32>
    %cst_41 = arith.constant -1.000000e+02 : f32
    %81 = vector.broadcast %cst_41 : f32 to vector<32x128xf32>
    %82 = arith.maximumf %80, %81 : vector<32x128xf32>
    %83 = arith.mulf %0, %77 : vector<32x128xf32>
    %cst_42 = arith.constant 1.000000e+00 : f32
    %84 = vector.broadcast %cst_42 : f32 to vector<32x128xf32>
    %85 = arith.subf %84, %0 : vector<32x128xf32>
    %86 = arith.mulf %85, %82 : vector<32x128xf32>
    %87 = arith.addf %83, %86 : vector<32x128xf32>
    %cst_43 = arith.constant dense<0.000000e+00> : vector<128xf32>
    %88 = vector.multi_reduction <add>, %87, %cst_43 [0] : vector<32x128xf32> to vector<128xf32>
    %89 = vector.shape_cast %88 : vector<128xf32> to vector<1x128xf32>
    %cst_44 = arith.constant 0.000000e+00 : f32
    %90 = vector.broadcast %cst_44 : f32 to vector<1x128xf32>
    %91 = arith.subf %90, %89 : vector<1x128xf32>
    %92 = arith.mulf %35, %35 : vector<16x128xf32>
    %93 = arith.mulf %31, %31 : vector<16x128xf32>
    %94 = arith.addf %92, %93 : vector<16x128xf32>
    %cst_45 = arith.constant 1.000000e+00 : f32
    %95 = vector.broadcast %cst_45 : f32 to vector<16x128xf32>
    %96 = arith.subf %94, %95 : vector<16x128xf32>
    %97 = arith.subf %96, %32 : vector<16x128xf32>
    %cst_46 = arith.constant dense<0.000000e+00> : vector<128xf32>
    %98 = vector.multi_reduction <add>, %97, %cst_46 [0] : vector<16x128xf32> to vector<128xf32>
    %99 = vector.shape_cast %98 : vector<128xf32> to vector<1x128xf32>
    %cst_47 = arith.constant 5.000000e-01 : f32
    %100 = vector.broadcast %cst_47 : f32 to vector<1x128xf32>
    %101 = arith.mulf %100, %99 : vector<1x128xf32>
    %102 = arith.addf %91, %101 : vector<1x128xf32>
    %c0_48 = arith.constant 0 : index
    %c0_49 = arith.constant 0 : index
    %103 = vector.load %arg5[%c0_48, %c0_49] : memref<1x128xf32, #tpu.memory_space<vmem>>, vector<1x128xf32>
    tpu.vector_store %arg5[%c0_48, %c0_49], %102 {strides = array<i32>} : memref<1x128xf32, #tpu.memory_space<vmem>>, vector<1x128xf32>,
    return
  }
  func.func @transform_0(%arg0: i32) -> (i32, i32) {
    %c0_i32 = arith.constant 0 : i32
    %c0_i32_0 = arith.constant 0 : i32
    return %c0_i32, %arg0 : i32, i32
  }
  func.func @transform_1(%arg0: i32) -> (i32, i32) {
    %c0_i32 = arith.constant 0 : i32
    %c0_i32_0 = arith.constant 0 : i32
    return %c0_i32, %arg0 : i32, i32
  }
  func.func @transform_2(%arg0: i32) -> (i32, i32) {
    %c0_i32 = arith.constant 0 : i32
    %c0_i32_0 = arith.constant 0 : i32
    %c0_i32_1 = arith.constant 0 : i32
    return %c0_i32, %c0_i32_0 : i32, i32
  }
  func.func @transform_3(%arg0: i32) -> (i32, i32) {
    %c0_i32 = arith.constant 0 : i32
    %c0_i32_0 = arith.constant 0 : i32
    return %c0_i32, %arg0 : i32, i32
  }
  func.func @transform_4(%arg0: i32) -> (i32, i32) {
    %c0_i32 = arith.constant 0 : i32
    %c0_i32_0 = arith.constant 0 : i32
    return %c0_i32, %arg0 : i32, i32
  }
}

</mosaic_0001>

<llo_original>
// kernel: vae_forward.1
$region0: #{vae_forward.1}
  #allocation0 [shape = 'u32[]', space=smem, size = 0x4, offset = 0x4, fixed_abs, tag = 'smem constant byte address 0x4 - core index']
  #allocation1 [shape = 'u32[72,128]{1,0:T(1,128)}', space=vmem, size = 0x9000, scoped, tag = 'internal scratch']
  %s0 = inlined_call_operand.vmem [shape: f32[32,256], index: 0, kind: input, shape index: {}]
  %s1 = inlined_call_operand.vmem [shape: f32[16,256], index: 1, kind: input, shape index: {}]
  %s2 = inlined_call_operand.vmem [shape: f32[320,128], index: 2, kind: input, shape index: {}]
  %s3 = inlined_call_operand.hbm [shape: f32[32,256], index: 3, kind: output, shape index: {0}]
  %s4 = inlined_call_operand.vmem [shape: f32[1,256], index: 4, kind: output, shape index: {1}]
  %5 = xla_tuple %s3, %s4
  %s6 = sld [smem:[#allocation0]]
  $region129: #{vae_forward.1} parent=0
    _
  %s8 = ssub.s32 1, %s6
  %s9 = scalar_select 0, %s8, %s6
  $region1: #{vae_forward.1} parent=0
    #allocation2 [shape = 'u8[32768]{0}', space=vmem, size = 0x8000, scoped, tag = 'input window, operand 0']
    #allocation3 [shape = 'u8[16384]{0}', space=vmem, size = 0x4000, scoped, tag = 'input window, operand 1']
    #allocation4 [shape = 'u8[32768]{0}', space=vmem, size = 0x8000, scoped, tag = 'output window, operand 0']
    #allocation5 [shape = 's32[2]{0}', space=sflag, size = 0x8, scoped, tag = 'scoped memory for vae_forward.1']
    %10 = vsyncpa [#allocation5], 0
    %s11 = scalar_lea.sflag [#allocation5], 1
    %12 = vsyncpa %s11, 0
    loop: start=0, step=1, limit=4
    $region2: #{vae_forward.1} parent=1 // loop_pre_header
      _
    $region3: #{vae_forward.1} parent=1 // loop_header
      %s14 = sphi 0, %s18
      %p15 = scmp.ge.s32.totalorder %s14, 4
      %s24 = sphi 0, %s26
      %s27 = sphi 0, %s24
      %s28 = sphi 0, %s27
      %s44 = sphi 0, %s28
      %s50 = sphi 0, %s52
      %s53 = sphi 0, %s50
      %s54 = sphi 0, %s53
      %s70 = sphi 0, %s54
      %s74 = sphi 0, %s74
      %s76 = sphi 0, %s74
      %s77 = sphi 0, %s76
      %s91 = sphi 0, %s77
      %s97 = sphi 0, %s99
      %s100 = sphi 0, %s97
      %s101 = sphi 0, %s100
      %s117 = sphi 0, %s101
      %s123 = sphi 0, %s125
      %s126 = sphi 0, %s123
      %s127 = sphi 0, %s126
      %s143 = sphi 0, %s127
    $region4: #{vae_forward.1} parent=1 // loop_header_branch
      %17 = sbr.rel (%p15) target = $region8
    $region5: #{vae_forward.1} parent=1 // loop_body
      %s19 = ssub.s32 %s14, 1
      %s20 = ssub.s32 %s14, 2
      %s21 = sadd.s32 %s14, 1
      %s22 = ssub.s32 %s14, %s21
      %p23 = scmp.eq.s32.totalorder %s22, 0
      %s25 = sadd.s32 %s24, 1
      %s26 = scalar_select %p23, %s24, %s25
      %p29 = pneg %p23
      %p30 = scmp.eq.s32.totalorder %s14, 1
      %p31 = por %p29, %p30
      %p32 = scmp.ne.s32.totalorder %s24, %s27
      %p33 = scmp.eq.s32.totalorder %s14, 0
      %p34 = por %p32, %p33
      %p35 = scmp.ne.s32.totalorder %s24, %s27
      %p36 = scmp.eq.s32.totalorder %s19, 1
      %p37 = por %p35, %p36
      %p38 = scmp.ne.s32.totalorder %s27, %s28
      %p39 = scmp.eq.s32.totalorder %s19, 0
      %p40 = por %p38, %p39
      %p41 = scmp.ne.s32.totalorder %s27, %s28
      %p42 = scmp.eq.s32.totalorder %s20, 1
      %p43 = por %p41, %p42
      %p45 = scmp.ne.s32.totalorder %s28, %s44
      %p46 = scmp.eq.s32.totalorder %s20, 0
      %p47 = por %p45, %p46
      %s48 = ssub.s32 %s14, %s21
      %p49 = scmp.eq.s32.totalorder %s48, 0
      %s51 = sadd.s32 %s50, 1
      %s52 = scalar_select %p49, %s50, %s51
      %p55 = pneg %p49
      %p56 = scmp.eq.s32.totalorder %s14, 1
      %p57 = por %p55, %p56
      %p58 = scmp.ne.s32.totalorder %s50, %s53
      %p59 = scmp.eq.s32.totalorder %s14, 0
      %p60 = por %p58, %p59
      %p61 = scmp.ne.s32.totalorder %s50, %s53
      %p62 = scmp.eq.s32.totalorder %s19, 1
      %p63 = por %p61, %p62
      %p64 = scmp.ne.s32.totalorder %s53, %s54
      %p65 = scmp.eq.s32.totalorder %s19, 0
      %p66 = por %p64, %p65
      %p67 = scmp.ne.s32.totalorder %s53, %s54
      %p68 = scmp.eq.s32.totalorder %s20, 1
      %p69 = por %p67, %p68
      %p71 = scmp.ne.s32.totalorder %s54, %s70
      %p72 = scmp.eq.s32.totalorder %s20, 0
      %p73 = por %p71, %p72
      %s75 = sadd.s32 %s74, 1
      %p78 = scmp.eq.s32.totalorder %s14, 1
      %p79 = scmp.ne.s32.totalorder %s74, %s76
      %p80 = scmp.eq.s32.totalorder %s14, 0
      %p81 = por %p79, %p80
      %p82 = scmp.ne.s32.totalorder %s74, %s76
      %p83 = scmp.eq.s32.totalorder %s19, 1
      %p84 = por %p82, %p83
      %p85 = scmp.ne.s32.totalorder %s76, %s77
      %p86 = scmp.eq.s32.totalorder %s19, 0
      %p87 = por %p85, %p86
      %p88 = scmp.ne.s32.totalorder %s76, %s77
      %p89 = scmp.eq.s32.totalorder %s20, 1
      %p90 = por %p88, %p89
      %p92 = scmp.ne.s32.totalorder %s77, %s91
      %p93 = scmp.eq.s32.totalorder %s20, 0
      %p94 = por %p92, %p93
      %s95 = ssub.s32 %s14, %s21
      %p96 = scmp.eq.s32.totalorder %s95, 0
      %s98 = sadd.s32 %s97, 1
      %s99 = scalar_select %p96, %s97, %s98
      %p102 = pneg %p96
      %p103 = scmp.eq.s32.totalorder %s14, 1
      %p104 = por %p102, %p103
      %p105 = scmp.ne.s32.totalorder %s97, %s100
      %p106 = scmp.eq.s32.totalorder %s14, 0
      %p107 = por %p105, %p106
      %p108 = scmp.ne.s32.totalorder %s97, %s100
      %p109 = scmp.eq.s32.totalorder %s19, 1
      %p110 = por %p108, %p109
      %p111 = scmp.ne.s32.totalorder %s100, %s101
      %p112 = scmp.eq.s32.totalorder %s19, 0
      %p113 = por %p111, %p112
      %p114 = scmp.ne.s32.totalorder %s100, %s101
      %p115 = scmp.eq.s32.totalorder %s20, 1
      %p116 = por %p114, %p115
      %p118 = scmp.ne.s32.totalorder %s101, %s117
      %p119 = scmp.eq.s32.totalorder %s20, 0
      %p120 = por %p118, %p119
      %s121 = ssub.s32 %s14, %s21
      %p122 = scmp.eq.s32.totalorder %s121, 0
      %s124 = sadd.s32 %s123, 1
      %s125 = scalar_select %p122, %s123, %s124
      %p128 = pneg %p122
      %p129 = scmp.eq.s32.totalorder %s14, 1
      %p130 = por %p128, %p129
      %p131 = scmp.ne.s32.totalorder %s123, %s126
      %p132 = scmp.eq.s32.totalorder %s14, 0
      %p133 = por %p131, %p132
      %p134 = scmp.ne.s32.totalorder %s123, %s126
      %p135 = scmp.eq.s32.totalorder %s19, 1
      %p136 = por %p134, %p135
      %p137 = scmp.ne.s32.totalorder %s126, %s127
      %p138 = scmp.eq.s32.totalorder %s19, 0
      %p139 = por %p137, %p138
      %p140 = scmp.ne.s32.totalorder %s126, %s127
      %p141 = scmp.eq.s32.totalorder %s20, 1
      %p142 = por %p140, %p141
      %p144 = scmp.ne.s32.totalorder %s127, %s143
      %p145 = scmp.eq.s32.totalorder %s20, 0
      %p146 = por %p144, %p145
      %p147 = scmp.le.s32.totalorder 1, %s14
      %p148 = scmp.lt.s32.totalorder %s14, 3
      %p149 = pnand %p147, %p148
      %p150 = pneg %p149
      // Predicated region
      $region9: #{vae_forward.1} parent=5 // pred_check
        _
      $region10: #{vae_forward.1} parent=5 // pred_check_branch
        %152 = sbr.rel (%p149) target = $region12
      $region11: #{vae_forward.1} parent=5 // pred_region
        %s153 = ssub.s32 %s14, 1
        // Predicated region
        $region13: #{vae_forward.1} parent=11 // pred_check
          %p154 = pneg %p87
        $region14: #{vae_forward.1} parent=11 // pred_check_branch
          %156 = sbr.rel (%p154) target = $region16
        $region15: #{vae_forward.1} parent=11 // pred_region
          _
        $region16: #{vae_forward.1} parent=11 // pred_fallthru
          _
      $region12: #{vae_forward.1} parent=5 // pred_fallthru
        _
      %p157 = scmp.lt.s32.totalorder %s14, 2
      // Predicated region
      $region17: #{vae_forward.1} parent=5 // pred_check
        %p158 = pneg %p157
      $region18: #{vae_forward.1} parent=5 // pred_check_branch
        %160 = sbr.rel (%p158) target = $region20
      $region19: #{vae_forward.1} parent=5 // pred_region
        // Predicated region
        $region21: #{vae_forward.1} parent=19 // pred_check
          %p161 = pneg %p34
        $region22: #{vae_forward.1} parent=19 // pred_check_branch
          %163 = sbr.rel (%p161) target = $region24
        $region23: #{vae_forward.1} parent=19 // pred_region
          %s164 = sand.u32 %s24, 1
          %s165 = sand.u32 %s24, 1
          %s166 = smul.addr %s165, 32
          %s167 = scalar_lea.vmem [#allocation2], %s166
          %s168 = smul.addr %s14, 8
          %s169 = scalar_lea.vmem %s0, %s168
          // Predicated region
          $region25: #{vae_forward.1} parent=23 // pred_check
            _
          $region26: #{vae_forward.1} parent=23 // pred_check_branch
            %171 = sbr.rel (0) target = $region28
          $region27: #{vae_forward.1} parent=23 // pred_region
            // Predicated region
            $region29: #{vae_forward.1} parent=27 // pred_check
              _
            $region30: #{vae_forward.1} parent=27 // pred_check_branch
              %173 = sbr.rel (0) target = $region32
            $region31: #{vae_forward.1} parent=27 // pred_region
              // Predicated region
              $region44: #{vae_forward.1} parent=31 // pred_check
                _
              $region45: #{vae_forward.1} parent=31 // pred_check_branch
                %195 = sbr.rel (0) target = $region47
              $region46: #{vae_forward.1} parent=31 // pred_region
                loop: start=0, step=1, limit=1
                $region48: #{vae_forward.1} parent=46 // loop_pre_header
                  _
                $region49: #{vae_forward.1} parent=46 // loop_header
                  %s197 = sphi 0, %s201
                  %p198 = scmp.ge.s32.totalorder %s197, 1
                  %s202 = sphi %s169, %s169
                  %s203 = sphi %s167, %s167
                $region50: #{vae_forward.1} parent=46 // loop_header_branch
                  %200 = sbr.rel (%p198) target = $region54
                $region51: #{vae_forward.1} parent=46 // loop_body
                  %v204 = vld [vmem:[%s202] sm:$0xff]
                  %205 = vst [vmem:[%s203] sm:$0xff] %v204
                  %v206 = vld [vmem:[%s202 + $0x10] sm:$0xff]
                  %207 = vst [vmem:[%s203 + $0x8] sm:$0xff] %v206
                  %v208 = vld [vmem:[%s202 + $0x20] sm:$0xff]
                  %209 = vst [vmem:[%s203 + $0x10] sm:$0xff] %v208
                  %v210 = vld [vmem:[%s202 + $0x30] sm:$0xff]
                  %211 = vst [vmem:[%s203 + $0x18] sm:$0xff] %v210
                $region52: #{vae_forward.1} parent=46 // loop_footer
                  %s201 = sadd.s32 1, %s197
                $region53: #{vae_forward.1} parent=46 // loop_footer_branch
                  %196 = sbr.rel target = $region49
                $region54: #{vae_forward.1} parent=46 // loop_exit
                  _
              $region47: #{vae_forward.1} parent=31 // pred_fallthru
                _
              // Predicated region
              $region55: #{vae_forward.1} parent=31 // pred_check
                _
              $region56: #{vae_forward.1} parent=31 // pred_check_branch
                %213 = sbr.rel target = $region58
              $region57: #{vae_forward.1} parent=31 // pred_region
                _
              $region58: #{vae_forward.1} parent=31 // pred_fallthru
                _
            $region32: #{vae_forward.1} parent=27 // pred_fallthru
              _
            // Predicated region
            $region33: #{vae_forward.1} parent=27 // pred_check
              _
            $region34: #{vae_forward.1} parent=27 // pred_check_branch
              %175 = sbr.rel target = $region36
            $region35: #{vae_forward.1} parent=27 // pred_region
              %s177 = ssub.s32 256, 1
              loop: start=0, step=1, limit=1
              $region37: #{vae_forward.1} parent=35 // loop_pre_header
                _
              $region38: #{vae_forward.1} parent=35 // loop_header
                %s179 = sphi 0, %s183
                %p180 = scmp.ge.s32.totalorder %s179, 1
                %s184 = sphi %s169, %s169
                %s185 = sphi %s167, %s167
              $region39: #{vae_forward.1} parent=35 // loop_header_branch
                %182 = sbr.rel (%p180) target = $region43
              $region40: #{vae_forward.1} parent=35 // loop_body
                %v186 = vld [vmem:[%s184] sm:%s177]
                %187 = vst [vmem:[%s185] sm:%s177] %v186
                %v188 = vld [vmem:[%s184 + $0x10] sm:%s177]
                %189 = vst [vmem:[%s185 + $0x8] sm:%s177] %v188
                %v190 = vld [vmem:[%s184 + $0x20] sm:%s177]
                %191 = vst [vmem:[%s185 + $0x10] sm:%s177] %v190
                %v192 = vld [vmem:[%s184 + $0x30] sm:%s177]
                %193 = vst [vmem:[%s185 + $0x18] sm:%s177] %v192
              $region41: #{vae_forward.1} parent=35 // loop_footer
                %s183 = sadd.s32 1, %s179
              $region42: #{vae_forward.1} parent=35 // loop_footer_branch
                %178 = sbr.rel target = $region38
              $region43: #{vae_forward.1} parent=35 // loop_exit
                _
            $region36: #{vae_forward.1} parent=27 // pred_fallthru
              _
          $region28: #{vae_forward.1} parent=23 // pred_fallthru
            _
          %214 = vnop
        $region24: #{vae_forward.1} parent=19 // pred_fallthru
          _
        // Predicated region
        $region59: #{vae_forward.1} parent=19 // pred_check
          %p215 = pneg %p60
        $region60: #{vae_forward.1} parent=19 // pred_check_branch
          %217 = sbr.rel (%p215) target = $region62
        $region61: #{vae_forward.1} parent=19 // pred_region
          %s218 = sand.u32 %s50, 1
          %s219 = sand.u32 %s50, 1
          %s220 = smul.addr %s219, 16
          %s221 = scalar_lea.vmem [#allocation3], %s220
          %s222 = smul.addr %s14, 8
          %s223 = scalar_lea.vmem %s1, %s222
          // Predicated region
          $region63: #{vae_forward.1} parent=61 // pred_check
            _
          $region64: #{vae_forward.1} parent=61 // pred_check_branch
            %225 = sbr.rel (0) target = $region66
          $region65: #{vae_forward.1} parent=61 // pred_region
            // Predicated region
            $region67: #{vae_forward.1} parent=65 // pred_check
              _
            $region68: #{vae_forward.1} parent=65 // pred_check_branch
              %227 = sbr.rel (0) target = $region70
            $region69: #{vae_forward.1} parent=65 // pred_region
              // Predicated region
              $region82: #{vae_forward.1} parent=69 // pred_check
                _
              $region83: #{vae_forward.1} parent=69 // pred_check_branch
                %245 = sbr.rel (0) target = $region85
              $region84: #{vae_forward.1} parent=69 // pred_region
                loop: start=0, step=1, limit=1
                $region86: #{vae_forward.1} parent=84 // loop_pre_header
                  _
                $region87: #{vae_forward.1} parent=84 // loop_header
                  %s247 = sphi 0, %s251
                  %p248 = scmp.ge.s32.totalorder %s247, 1
                  %s252 = sphi %s223, %s223
                  %s253 = sphi %s221, %s221
                $region88: #{vae_forward.1} parent=84 // loop_header_branch
                  %250 = sbr.rel (%p248) target = $region92
                $region89: #{vae_forward.1} parent=84 // loop_body
                  %v254 = vld [vmem:[%s252] sm:$0xff]
                  %255 = vst [vmem:[%s253] sm:$0xff] %v254
                  %v256 = vld [vmem:[%s252 + $0x10] sm:$0xff]
                  %257 = vst [vmem:[%s253 + $0x8] sm:$0xff] %v256
                $region90: #{vae_forward.1} parent=84 // loop_footer
                  %s251 = sadd.s32 1, %s247
                $region91: #{vae_forward.1} parent=84 // loop_footer_branch
                  %246 = sbr.rel target = $region87
                $region92: #{vae_forward.1} parent=84 // loop_exit
                  _
              $region85: #{vae_forward.1} parent=69 // pred_fallthru
                _
              // Predicated region
              $region93: #{vae_forward.1} parent=69 // pred_check
                _
              $region94: #{vae_forward.1} parent=69 // pred_check_branch
                %259 = sbr.rel target = $region96
              $region95: #{vae_forward.1} parent=69 // pred_region
                _
              $region96: #{vae_forward.1} parent=69 // pred_fallthru
                _
            $region70: #{vae_forward.1} parent=65 // pred_fallthru
              _
            // Predicated region
            $region71: #{vae_forward.1} parent=65 // pred_check
              _
            $region72: #{vae_forward.1} parent=65 // pred_check_branch
              %229 = sbr.rel target = $region74
            $region73: #{vae_forward.1} parent=65 // pred_region
              %s231 = ssub.s32 256, 1
              loop: start=0, step=1, limit=1
              $region75: #{vae_forward.1} parent=73 // loop_pre_header
                _
              $region76: #{vae_forward.1} parent=73 // loop_header
                %s233 = sphi 0, %s237
                %p234 = scmp.ge.s32.totalorder %s233, 1
                %s238 = sphi %s223, %s223
                %s239 = sphi %s221, %s221
              $region77: #{vae_forward.1} parent=73 // loop_header_branch
                %236 = sbr.rel (%p234) target = $region81
              $region78: #{vae_forward.1} parent=73 // loop_body
                %v240 = vld [vmem:[%s238] sm:%s231]
                %241 = vst [vmem:[%s239] sm:%s231] %v240
                %v242 = vld [vmem:[%s238 + $0x10] sm:%s231]
                %243 = vst [vmem:[%s239 + $0x8] sm:%s231] %v242
              $region79: #{vae_forward.1} parent=73 // loop_footer
                %s237 = sadd.s32 1, %s233
              $region80: #{vae_forward.1} parent=73 // loop_footer_branch
                %232 = sbr.rel target = $region76
              $region81: #{vae_forward.1} parent=73 // loop_exit
                _
            $region74: #{vae_forward.1} parent=65 // pred_fallthru
              _
          $region66: #{vae_forward.1} parent=61 // pred_fallthru
            _
          %260 = vnop
        $region62: #{vae_forward.1} parent=19 // pred_fallthru
          _
      $region20: #{vae_forward.1} parent=5 // pred_fallthru
        _
      %p261 = scmp.le.s32.totalorder 1, %s14
      %p262 = scmp.lt.s32.totalorder %s14, 3
      %p263 = pnand %p261, %p262
      %p264 = pneg %p263
      // Predicated region
      $region97: #{vae_forward.1} parent=5 // pred_check
        _
      $region98: #{vae_forward.1} parent=5 // pred_check_branch
        %266 = sbr.rel (%p263) target = $region100
      $region99: #{vae_forward.1} parent=5 // pred_region
        %s267 = ssub.s32 %s14, 1
        %s268 = sand.u32 %s27, 1
        %s269 = sand.u32 %s27, 1
        %s270 = smul.addr %s269, 32
        %s271 = scalar_lea.vmem [#allocation2], %s270
        // Predicated region
        $region101: #{vae_forward.1} parent=99 // pred_check
          %p272 = pneg %p40
        $region102: #{vae_forward.1} parent=99 // pred_check_branch
          %274 = sbr.rel (%p272) target = $region104
        $region103: #{vae_forward.1} parent=99 // pred_region
          _
        $region104: #{vae_forward.1} parent=99 // pred_fallthru
          _
        %s275 = sand.u32 %s53, 1
        %s276 = sand.u32 %s53, 1
        %s277 = smul.addr %s276, 16
        %s278 = scalar_lea.vmem [#allocation3], %s277
        // Predicated region
        $region105: #{vae_forward.1} parent=99 // pred_check
          %p279 = pneg %p66
        $region106: #{vae_forward.1} parent=99 // pred_check_branch
          %281 = sbr.rel (%p279) target = $region108
        $region107: #{vae_forward.1} parent=99 // pred_region
          _
        $region108: #{vae_forward.1} parent=99 // pred_fallthru
          _
        %s282 = sand.u32 %s27, 1
        %s283 = sand.u32 %s27, 1
        %s284 = smul.addr %s283, 32
        %s285 = scalar_lea.vmem [#allocation2], %s284
        %p286 = pneg %p40
        %p287 = pneg %p37
        %s288 = sand.u32 %s53, 1
        %s289 = sand.u32 %s53, 1
        %s290 = smul.addr %s289, 16
        %s291 = scalar_lea.vmem [#allocation3], %s290
        %p292 = pneg %p66
        %p293 = pneg %p63
        %p294 = pneg %p87
        %p295 = pneg %p84
        %p296 = pneg %p113
        %p297 = pneg %p110
        %s298 = sand.u32 %s100, 1
        %s299 = scalar_lea.sflag [#allocation5], %s298
        %s300 = sand.u32 %s100, 1
        %s301 = smul.addr %s300, 32
        %s302 = scalar_lea.vmem [#allocation4], %s301
        %p303 = pneg %p139
        %p304 = pneg %p136
        %p305 = scmp.lt.s32.totalorder %s19, 1
        %s306 = scalar_select %p305, %s19, 1
        %s307 = scalar_lea.vmem %s4, %s306
        %p308 = scmp.lt.s32.totalorder %s19, 1
        %s309 = scalar_select %p308, %s19, 1
        %s310 = scalar_lea.vmem %s4, %s309
        %v311 = vld [vmem:[%s271] sm:$0xff]
        %v312 = vld [vmem:[%s271 + $0x8] sm:$0xff]
        %v313 = vld [vmem:[%s271 + $0x10] sm:$0xff]
        %v314 = vld [vmem:[%s271 + $0x18] sm:$0xff]
        %v315 = vld [vmem:[%s278] sm:$0xff]
        %v316 = vld [vmem:[%s278 + $0x8] sm:$0xff]
        %v317 = vld [vmem:[%s2] sm:$0xff]
        %v318 = vld [vmem:[%s2 + $0x8] sm:$0xff]
        %v319 = vld [vmem:[%s2 + $0x10] sm:$0xff]
        %v320 = vld [vmem:[%s2 + $0x18] sm:$0xff]
        %v321 = vld [vmem:[%s2 + $0x20] sm:$0xff]
        %v322 = vld [vmem:[%s2 + $0x28] sm:$0xff]
        %v323 = vld [vmem:[%s2 + $0x30] sm:$0xff]
        %v324 = vld [vmem:[%s2 + $0x38] sm:$0xff]
        %v325 = vld [vmem:[%s2 + $0x100] sm:$0xff]
        %v326 = vld [vmem:[%s2 + $0x108] sm:$0xff]
        %v327 = vld [vmem:[%s2 + $0x110] sm:$0xff]
        %v328 = vld [vmem:[%s2 + $0x118] sm:$0xff]
        %v329 = vld [vmem:[%s2 + $0x120] sm:$0xff]
        %v330 = vld [vmem:[%s2 + $0x128] sm:$0xff]
        %v331 = vld [vmem:[%s2 + $0x130] sm:$0xff]
        %v332 = vld [vmem:[%s2 + $0x138] sm:$0xff]
        %334 = vset.pattern.permute.xlu0 0
        %335 = vperm.xlu0 %334, %v325
        %v336 = vpop.permute.xlu0 %335
        %339 = vset.pattern.permute.xlu0 0
        %340 = vperm.xlu0 %339, %v326
        %v341 = vpop.permute.xlu0 %340
        %344 = vset.pattern.permute.xlu0 0
        %345 = vperm.xlu0 %344, %v327
        %v346 = vpop.permute.xlu0 %345
        %349 = vset.pattern.permute.xlu0 0
        %350 = vperm.xlu0 %349, %v328
        %v351 = vpop.permute.xlu0 %350
        %354 = vset.pattern.permute.xlu0 0
        %355 = vperm.xlu0 %354, %v329
        %v356 = vpop.permute.xlu0 %355
        %359 = vset.pattern.permute.xlu0 0
        %360 = vperm.xlu0 %359, %v330
        %v361 = vpop.permute.xlu0 %360
        %364 = vset.pattern.permute.xlu0 0
        %365 = vperm.xlu0 %364, %v331
        %v366 = vpop.permute.xlu0 %365
        %369 = vset.pattern.permute.xlu0 0
        %370 = vperm.xlu0 %369, %v332
        %v371 = vpop.permute.xlu0 %370
        %vm373 = vcmask 261120
        %v375 = vsel %vm373, %v317, 0
        %v378 = vsel %vm373, %v318, 0
        %v381 = vsel %vm373, %v319, 0
        %v384 = vsel %vm373, %v320, 0
        %v387 = vsel %vm373, %v321, 0
        %v390 = vsel %vm373, %v322, 0
        %v393 = vsel %vm373, %v323, 0
        %v396 = vsel %vm373, %v324, 0
        %398 = vmatpush.msra.mxu0 0.0
        %399 = vmatpush.msra.mxu0 0.0
        %400 = vmatpush.msra.mxu0 0.0
        %401 = vmatpush.msra.mxu0 0.0
        %402 = vmatpush.msra.mxu0 0.0
        %403 = vmatpush.msra.mxu0 0.0
        %404 = vmatpush.msra.mxu0 0.0
        %405 = vmatpush.msra.mxu0 0.0
        %406 = vmatpush.msra.mxu0 0.0
        %407 = vmatpush.msra.mxu0 0.0
        %408 = vmatpush.msra.mxu0 0.0
        %409 = vmatpush.msra.mxu0 0.0
        %410 = vmatpush.msra.mxu0 %v314
        %411 = vmatpush.msra.mxu0 %v313
        %412 = vmatpush.msra.mxu0 %v312
        %413 = vmatpush.msra.mxu0 %v311
        %414 = vmatmul.f32.gmra.mxu0 %v375
        %v415 = vpop.f32.mrf.mxu0
        %v416 = vadd.f32 %v336, %v415
        %417 = vmatmul.f32.gmra.mxu0 %v378
        %v418 = vpop.f32.mrf.mxu0
        %v419 = vadd.f32 %v341, %v418
        %420 = vmatmul.f32.gmra.mxu0 %v381
        %v421 = vpop.f32.mrf.mxu0
        %v422 = vadd.f32 %v346, %v421
        %423 = vmatmul.f32.gmra.mxu0 %v384
        %v424 = vpop.f32.mrf.mxu0
        %v425 = vadd.f32 %v351, %v424
        %426 = vmatmul.f32.gmra.mxu0 %v387
        %v427 = vpop.f32.mrf.mxu0
        %v428 = vadd.f32 %v356, %v427
        %429 = vmatmul.f32.gmra.mxu0 %v390
        %v430 = vpop.f32.mrf.mxu0
        %v431 = vadd.f32 %v361, %v430
        %432 = vmatmul.f32.gmra.mxu0 %v393
        %v433 = vpop.f32.mrf.mxu0
        %v434 = vadd.f32 %v366, %v433
        %435 = vmatmul.f32.gmra.mxu0 %v396
        %v436 = vpop.f32.mrf.mxu0
        %v437 = vadd.f32 %v371, %v436
        %438 = vdwg.mxu0
        %v439 = vmul.f32 %v416, 0.5
        %v440 = vmul.f32 %v419, 0.5
        %v441 = vmul.f32 %v422, 0.5
        %v442 = vmul.f32 %v425, 0.5
        %v443 = vmul.f32 %v428, 0.5
        %v444 = vmul.f32 %v431, 0.5
        %v445 = vmul.f32 %v434, 0.5
        %v446 = vmul.f32 %v437, 0.5
        %v447 = vtanh.pop %v439
        %v448 = vtanh.pop %v440
        %v449 = vtanh.pop %v441
        %v450 = vtanh.pop %v442
        %v451 = vtanh.pop %v443
        %v452 = vtanh.pop %v444
        %v453 = vtanh.pop %v445
        %v454 = vtanh.pop %v446
        %v455 = vmul.f32 %v447, 0.5
        %v456 = vmul.f32 %v448, 0.5
        %v457 = vmul.f32 %v449, 0.5
        %v458 = vmul.f32 %v450, 0.5
        %v459 = vmul.f32 %v451, 0.5
        %v460 = vmul.f32 %v452, 0.5
        %v461 = vmul.f32 %v453, 0.5
        %v462 = vmul.f32 %v454, 0.5
        %v463 = vadd.f32 %v455, 0.5
        %v464 = vadd.f32 %v456, 0.5
        %v465 = vadd.f32 %v457, 0.5
        %v466 = vadd.f32 %v458, 0.5
        %v467 = vadd.f32 %v459, 0.5
        %v468 = vadd.f32 %v460, 0.5
        %v469 = vadd.f32 %v461, 0.5
        %v470 = vadd.f32 %v462, 0.5
        %v471 = vld [vmem:[%s2 + $0x40] sm:$0xff]
        %v472 = vld [vmem:[%s2 + $0x48] sm:$0xff]
        %v473 = vld [vmem:[%s2 + $0x50] sm:$0xff]
        %v474 = vld [vmem:[%s2 + $0x58] sm:$0xff]
        %v475 = vld [vmem:[%s2 + $0x100] sm:$0xff]
        %v476 = vld [vmem:[%s2 + $0x108] sm:$0xff]
        %v477 = vld [vmem:[%s2 + $0x110] sm:$0xff]
        %v478 = vld [vmem:[%s2 + $0x118] sm:$0xff]
        %480 = vset.pattern.permute.xlu0 1
        %481 = vperm.xlu0 %480, %v475
        %v482 = vpop.permute.xlu0 %481
        %485 = vset.pattern.permute.xlu0 1
        %486 = vperm.xlu0 %485, %v476
        %v487 = vpop.permute.xlu0 %486
        %490 = vset.pattern.permute.xlu0 1
        %491 = vperm.xlu0 %490, %v477
        %v492 = vpop.permute.xlu0 %491
        %495 = vset.pattern.permute.xlu0 1
        %496 = vperm.xlu0 %495, %v478
        %v497 = vpop.permute.xlu0 %496
        %vm499 = vcmask 523264
        %v501 = vsel %vm499, %v471, 0
        %v504 = vsel %vm499, %v472, 0
        %v507 = vsel %vm499, %v473, 0
        %v510 = vsel %vm499, %v474, 0
        %512 = vmatpush.msra.mxu0 0.0
        %513 = vmatpush.msra.mxu0 0.0
        %514 = vmatpush.msra.mxu0 0.0
        %515 = vmatpush.msra.mxu0 0.0
        %516 = vmatpush.msra.mxu0 0.0
        %517 = vmatpush.msra.mxu0 0.0
        %518 = vmatpush.msra.mxu0 0.0
        %519 = vmatpush.msra.mxu0 0.0
        %520 = vmatpush.msra.mxu0 %v470
        %521 = vmatpush.msra.mxu0 %v469
        %522 = vmatpush.msra.mxu0 %v468
        %523 = vmatpush.msra.mxu0 %v467
        %524 = vmatpush.msra.mxu0 %v466
        %525 = vmatpush.msra.mxu0 %v465
        %526 = vmatpush.msra.mxu0 %v464
        %527 = vmatpush.msra.mxu0 %v463
        %528 = vmatmul.f32.gmra.mxu0 %v501
        %v529 = vpop.f32.mrf.mxu0
        %v530 = vadd.f32 %v482, %v529
        %531 = vmatmul.f32.gmra.mxu0 %v504
        %v532 = vpop.f32.mrf.mxu0
        %v533 = vadd.f32 %v487, %v532
        %534 = vmatmul.f32.gmra.mxu0 %v507
        %v535 = vpop.f32.mrf.mxu0
        %v536 = vadd.f32 %v492, %v535
        %537 = vmatmul.f32.gmra.mxu0 %v510
        %v538 = vpop.f32.mrf.mxu0
        %v539 = vadd.f32 %v497, %v538
        %540 = vdwg.mxu0
        %v541 = vmul.f32 %v530, 0.5
        %v542 = vmul.f32 %v533, 0.5
        %v543 = vmul.f32 %v536, 0.5
        %v544 = vmul.f32 %v539, 0.5
        %v545 = vtanh.pop %v541
        %v546 = vtanh.pop %v542
        %v547 = vtanh.pop %v543
        %v548 = vtanh.pop %v544
        %v549 = vmul.f32 %v545, 0.5
        %v550 = vmul.f32 %v546, 0.5
        %v551 = vmul.f32 %v547, 0.5
        %v552 = vmul.f32 %v548, 0.5
        %v553 = vadd.f32 %v549, 0.5
        %v554 = vadd.f32 %v550, 0.5
        %v555 = vadd.f32 %v551, 0.5
        %v556 = vadd.f32 %v552, 0.5
        %v557 = vld [vmem:[%s2 + $0x60] sm:$0xff]
        %v558 = vld [vmem:[%s2 + $0x68] sm:$0xff]
        %v559 = vld [vmem:[%s2 + $0x70] sm:$0xff]
        %v560 = vld [vmem:[%s2 + $0x78] sm:$0xff]
        %561 = vset.pattern.permute.xlu0 2
        %562 = vperm.xlu0 %561, %v475
        %v563 = vpop.permute.xlu0 %562
        %565 = vset.pattern.permute.xlu0 2
        %566 = vperm.xlu0 %565, %v476
        %v567 = vpop.permute.xlu0 %566
        %569 = vset.pattern.permute.xlu0 2
        %570 = vperm.xlu0 %569, %v477
        %v571 = vpop.permute.xlu0 %570
        %573 = vset.pattern.permute.xlu0 2
        %574 = vperm.xlu0 %573, %v478
        %v575 = vpop.permute.xlu0 %574
        %v578 = vsel %vm373, %v557, 0
        %v581 = vsel %vm373, %v558, 0
        %v584 = vsel %vm373, %v559, 0
        %v587 = vsel %vm373, %v560, 0
        %589 = vmatpush.msra.mxu0 0.0
        %590 = vmatpush.msra.mxu0 0.0
        %591 = vmatpush.msra.mxu0 0.0
        %592 = vmatpush.msra.mxu0 0.0
        %593 = vmatpush.msra.mxu0 0.0
        %594 = vmatpush.msra.mxu0 0.0
        %595 = vmatpush.msra.mxu0 0.0
        %596 = vmatpush.msra.mxu0 0.0
        %597 = vmatpush.msra.mxu0 0.0
        %598 = vmatpush.msra.mxu0 0.0
        %599 = vmatpush.msra.mxu0 0.0
        %600 = vmatpush.msra.mxu0 0.0
        %601 = vmatpush.msra.mxu0 %v556
        %602 = vmatpush.msra.mxu0 %v555
        %603 = vmatpush.msra.mxu0 %v554
        %604 = vmatpush.msra.mxu0 %v553
        %605 = vmatmul.f32.gmra.mxu0 %v578
        %v606 = vpop.f32.mrf.mxu0
        %v607 = vadd.f32 %v563, %v606
        %608 = vmatmul.f32.gmra.mxu0 %v581
        %v609 = vpop.f32.mrf.mxu0
        %v610 = vadd.f32 %v567, %v609
        %611 = vmatmul.f32.gmra.mxu0 %v584
        %v612 = vpop.f32.mrf.mxu0
        %v613 = vadd.f32 %v571, %v612
        %614 = vmatmul.f32.gmra.mxu0 %v587
        %v615 = vpop.f32.mrf.mxu0
        %v616 = vadd.f32 %v575, %v615
        %617 = vdwg.mxu0
        %v618 = vmul.f32 %v613, 0.5
        %v619 = vmul.f32 %v616, 0.5
        %v620 = vmul.f32 %v618, 1.442695
        %v621 = vpow.pop %v620
        %v622 = vmul.f32 %v619, 1.442695
        %v623 = vpow.pop %v622
        %v624 = vmul.f32 %v621, %v315
        %v625 = vmul.f32 %v623, %v316
        %v626 = vadd.f32 %v607, %v624
        %v627 = vadd.f32 %v610, %v625
        %v628 = vld [vmem:[%s2 + $0x80] sm:$0xff]
        %v629 = vld [vmem:[%s2 + $0x88] sm:$0xff]
        %v630 = vld [vmem:[%s2 + $0x90] sm:$0xff]
        %v631 = vld [vmem:[%s2 + $0x98] sm:$0xff]
        %632 = vset.pattern.permute.xlu0 3
        %633 = vperm.xlu0 %632, %v475
        %v634 = vpop.permute.xlu0 %633
        %636 = vset.pattern.permute.xlu0 3
        %637 = vperm.xlu0 %636, %v476
        %v638 = vpop.permute.xlu0 %637
        %640 = vset.pattern.permute.xlu0 3
        %641 = vperm.xlu0 %640, %v477
        %v642 = vpop.permute.xlu0 %641
        %644 = vset.pattern.permute.xlu0 3
        %645 = vperm.xlu0 %644, %v478
        %v646 = vpop.permute.xlu0 %645
        %vm648 = vcmask 130048
        %v650 = vsel %vm648, %v628, 0
        %v653 = vsel %vm648, %v629, 0
        %v656 = vsel %vm648, %v630, 0
        %v659 = vsel %vm648, %v631, 0
        %661 = vmatpush.msra.mxu0 0.0
        %662 = vmatpush.msra.mxu0 0.0
        %663 = vmatpush.msra.mxu0 0.0
        %664 = vmatpush.msra.mxu0 0.0
        %665 = vmatpush.msra.mxu0 0.0
        %666 = vmatpush.msra.mxu0 0.0
        %667 = vmatpush.msra.mxu0 0.0
        %668 = vmatpush.msra.mxu0 0.0
        %669 = vmatpush.msra.mxu0 0.0
        %670 = vmatpush.msra.mxu0 0.0
        %671 = vmatpush.msra.mxu0 0.0
        %672 = vmatpush.msra.mxu0 0.0
        %673 = vmatpush.msra.mxu0 0.0
        %674 = vmatpush.msra.mxu0 0.0
        %675 = vmatpush.msra.mxu0 %v627
        %676 = vmatpush.msra.mxu0 %v626
        %677 = vmatmul.f32.gmra.mxu0 %v650
        %v678 = vpop.f32.mrf.mxu0
        %v679 = vadd.f32 %v634, %v678
        %680 = vmatmul.f32.gmra.mxu0 %v653
        %v681 = vpop.f32.mrf.mxu0
        %v682 = vadd.f32 %v638, %v681
        %683 = vmatmul.f32.gmra.mxu0 %v656
        %v684 = vpop.f32.mrf.mxu0
        %v685 = vadd.f32 %v642, %v684
        %686 = vmatmul.f32.gmra.mxu0 %v659
        %v687 = vpop.f32.mrf.mxu0
        %v688 = vadd.f32 %v646, %v687
        %689 = vdwg.mxu0
        %v690 = vmul.f32 %v679, 0.5
        %v691 = vmul.f32 %v682, 0.5
        %v692 = vmul.f32 %v685, 0.5
        %v693 = vmul.f32 %v688, 0.5
        %v694 = vtanh.pop %v690
        %v695 = vtanh.pop %v691
        %v696 = vtanh.pop %v692
        %v697 = vtanh.pop %v693
        %v698 = vmul.f32 %v694, 0.5
        %v699 = vmul.f32 %v695, 0.5
        %v700 = vmul.f32 %v696, 0.5
        %v701 = vmul.f32 %v697, 0.5
        %v702 = vadd.f32 %v698, 0.5
        %v703 = vadd.f32 %v699, 0.5
        %v704 = vadd.f32 %v700, 0.5
        %v705 = vadd.f32 %v701, 0.5
        %v706 = vld [vmem:[%s2 + $0xa0] sm:$0xff]
        %v707 = vld [vmem:[%s2 + $0xa8] sm:$0xff]
        %v708 = vld [vmem:[%s2 + $0xb0] sm:$0xff]
        %v709 = vld [vmem:[%s2 + $0xb8] sm:$0xff]
        %v710 = vld [vmem:[%s2 + $0xc0] sm:$0xff]
        %v711 = vld [vmem:[%s2 + $0xc8] sm:$0xff]
        %v712 = vld [vmem:[%s2 + $0xd0] sm:$0xff]
        %v713 = vld [vmem:[%s2 + $0xd8] sm:$0xff]
        %714 = vset.pattern.permute.xlu0 4
        %715 = vperm.xlu0 %714, %v325
        %v716 = vpop.permute.xlu0 %715
        %718 = vset.pattern.permute.xlu0 4
        %719 = vperm.xlu0 %718, %v326
        %v720 = vpop.permute.xlu0 %719
        %722 = vset.pattern.permute.xlu0 4
        %723 = vperm.xlu0 %722, %v327
        %v724 = vpop.permute.xlu0 %723
        %726 = vset.pattern.permute.xlu0 4
        %727 = vperm.xlu0 %726, %v328
        %v728 = vpop.permute.xlu0 %727
        %730 = vset.pattern.permute.xlu0 4
        %731 = vperm.xlu0 %730, %v329
        %v732 = vpop.permute.xlu0 %731
        %734 = vset.pattern.permute.xlu0 4
        %735 = vperm.xlu0 %734, %v330
        %v736 = vpop.permute.xlu0 %735
        %738 = vset.pattern.permute.xlu0 4
        %739 = vperm.xlu0 %738, %v331
        %v740 = vpop.permute.xlu0 %739
        %742 = vset.pattern.permute.xlu0 4
        %743 = vperm.xlu0 %742, %v332
        %v744 = vpop.permute.xlu0 %743
        %v747 = vsel %vm373, %v706, 0
        %v750 = vsel %vm373, %v707, 0
        %v753 = vsel %vm373, %v708, 0
        %v756 = vsel %vm373, %v709, 0
        %v759 = vsel %vm373, %v710, 0
        %v762 = vsel %vm373, %v711, 0
        %v765 = vsel %vm373, %v712, 0
        %v768 = vsel %vm373, %v713, 0
        %770 = vmatpush.msra.mxu0 0.0
        %771 = vmatpush.msra.mxu0 0.0
        %772 = vmatpush.msra.mxu0 0.0
        %773 = vmatpush.msra.mxu0 0.0
        %774 = vmatpush.msra.mxu0 0.0
        %775 = vmatpush.msra.mxu0 0.0
        %776 = vmatpush.msra.mxu0 0.0
        %777 = vmatpush.msra.mxu0 0.0
        %778 = vmatpush.msra.mxu0 0.0
        %779 = vmatpush.msra.mxu0 0.0
        %780 = vmatpush.msra.mxu0 0.0
        %781 = vmatpush.msra.mxu0 0.0
        %782 = vmatpush.msra.mxu0 %v705
        %783 = vmatpush.msra.mxu0 %v704
        %784 = vmatpush.msra.mxu0 %v703
        %785 = vmatpush.msra.mxu0 %v702
        %786 = vmatmul.f32.gmra.mxu0 %v747
        %v787 = vpop.f32.mrf.mxu0
        %v788 = vadd.f32 %v716, %v787
        %789 = vmatmul.f32.gmra.mxu0 %v750
        %v790 = vpop.f32.mrf.mxu0
        %v791 = vadd.f32 %v720, %v790
        %792 = vmatmul.f32.gmra.mxu0 %v753
        %v793 = vpop.f32.mrf.mxu0
        %v794 = vadd.f32 %v724, %v793
        %795 = vmatmul.f32.gmra.mxu0 %v756
        %v796 = vpop.f32.mrf.mxu0
        %v797 = vadd.f32 %v728, %v796
        %798 = vmatmul.f32.gmra.mxu0 %v759
        %v799 = vpop.f32.mrf.mxu0
        %v800 = vadd.f32 %v732, %v799
        %801 = vmatmul.f32.gmra.mxu0 %v762
        %v802 = vpop.f32.mrf.mxu0
        %v803 = vadd.f32 %v736, %v802
        %804 = vmatmul.f32.gmra.mxu0 %v765
        %v805 = vpop.f32.mrf.mxu0
        %v806 = vadd.f32 %v740, %v805
        %807 = vmatmul.f32.gmra.mxu0 %v768
        %v808 = vpop.f32.mrf.mxu0
        %v809 = vadd.f32 %v744, %v808
        %810 = vdwg.mxu0
        %v811 = vmul.f32 %v788, 0.5
        %v812 = vmul.f32 %v791, 0.5
        %v813 = vmul.f32 %v794, 0.5
        %v814 = vmul.f32 %v797, 0.5
        %v815 = vmul.f32 %v800, 0.5
        %v816 = vmul.f32 %v803, 0.5
        %v817 = vmul.f32 %v806, 0.5
        %v818 = vmul.f32 %v809, 0.5
        %v819 = vtanh.pop %v811
        %v820 = vtanh.pop %v812
        %v821 = vtanh.pop %v813
        %v822 = vtanh.pop %v814
        %v823 = vtanh.pop %v815
        %v824 = vtanh.pop %v816
        %v825 = vtanh.pop %v817
        %v826 = vtanh.pop %v818
        %v827 = vmul.f32 %v819, 0.5
        %v828 = vmul.f32 %v820, 0.5
        %v829 = vmul.f32 %v821, 0.5
        %v830 = vmul.f32 %v822, 0.5
        %v831 = vmul.f32 %v823, 0.5
        %v832 = vmul.f32 %v824, 0.5
        %v833 = vmul.f32 %v825, 0.5
        %v834 = vmul.f32 %v826, 0.5
        %v835 = vadd.f32 %v827, 0.5
        %v836 = vadd.f32 %v828, 0.5
        %v837 = vadd.f32 %v829, 0.5
        %v838 = vadd.f32 %v830, 0.5
        %v839 = vadd.f32 %v831, 0.5
        %v840 = vadd.f32 %v832, 0.5
        %v841 = vadd.f32 %v833, 0.5
        %v842 = vadd.f32 %v834, 0.5
        %v843 = vld [vmem:[%s2 + $0xe0] sm:$0xff]
        %v844 = vld [vmem:[%s2 + $0xe8] sm:$0xff]
        %v845 = vld [vmem:[%s2 + $0xf0] sm:$0xff]
        %v846 = vld [vmem:[%s2 + $0xf8] sm:$0xff]
        %847 = vset.pattern.permute.xlu0 5
        %848 = vperm.xlu0 %847, %v475
        %v849 = vpop.permute.xlu0 %848
        %851 = vset.pattern.permute.xlu0 5
        %852 = vperm.xlu0 %851, %v476
        %v853 = vpop.permute.xlu0 %852
        %855 = vset.pattern.permute.xlu0 5
        %856 = vperm.xlu0 %855, %v477
        %v857 = vpop.permute.xlu0 %856
        %859 = vset.pattern.permute.xlu0 5
        %860 = vperm.xlu0 %859, %v478
        %v861 = vpop.permute.xlu0 %860
        %v864 = vsel %vm499, %v843, 0
        %v867 = vsel %vm499, %v844, 0
        %v870 = vsel %vm499, %v845, 0
        %v873 = vsel %vm499, %v846, 0
        %875 = vmatpush.msra.mxu0 0.0
        %876 = vmatpush.msra.mxu0 0.0
        %877 = vmatpush.msra.mxu0 0.0
        %878 = vmatpush.msra.mxu0 0.0
        %879 = vmatpush.msra.mxu0 0.0
        %880 = vmatpush.msra.mxu0 0.0
        %881 = vmatpush.msra.mxu0 0.0
        %882 = vmatpush.msra.mxu0 0.0
        %883 = vmatpush.msra.mxu0 %v842
        %884 = vmatpush.msra.mxu0 %v841
        %885 = vmatpush.msra.mxu0 %v840
        %886 = vmatpush.msra.mxu0 %v839
        %887 = vmatpush.msra.mxu0 %v838
        %888 = vmatpush.msra.mxu0 %v837
        %889 = vmatpush.msra.mxu0 %v836
        %890 = vmatpush.msra.mxu0 %v835
        %891 = vmatmul.f32.gmra.mxu0 %v864
        %v892 = vpop.f32.mrf.mxu0
        %v893 = vadd.f32 %v849, %v892
        %894 = vmatmul.f32.gmra.mxu0 %v867
        %v895 = vpop.f32.mrf.mxu0
        %v896 = vadd.f32 %v853, %v895
        %897 = vmatmul.f32.gmra.mxu0 %v870
        %v898 = vpop.f32.mrf.mxu0
        %v899 = vadd.f32 %v857, %v898
        %900 = vmatmul.f32.gmra.mxu0 %v873
        %v901 = vpop.f32.mrf.mxu0
        %v902 = vadd.f32 %v861, %v901
        %903 = vdwg.mxu0
        %v904 = vmul.f32 %v893, 0.5
        %v905 = vmul.f32 %v896, 0.5
        %v906 = vmul.f32 %v899, 0.5
        %v907 = vmul.f32 %v902, 0.5
        %v908 = vtanh.pop %v904
        %v909 = vtanh.pop %v905
        %v910 = vtanh.pop %v906
        %v911 = vtanh.pop %v907
        %v912 = vmul.f32 %v908, 0.5
        %v913 = vmul.f32 %v909, 0.5
        %v914 = vmul.f32 %v910, 0.5
        %v915 = vmul.f32 %v911, 0.5
        %v916 = vadd.f32 %v912, 0.5
        %v917 = vadd.f32 %v913, 0.5
        %v918 = vadd.f32 %v914, 0.5
        %v919 = vadd.f32 %v915, 0.5
        %920 = vst [vmem:[%s302] sm:$0xff] %v916
        %921 = vst [vmem:[%s302 + $0x8] sm:$0xff] %v917
        %922 = vst [vmem:[%s302 + $0x10] sm:$0xff] %v918
        %923 = vst [vmem:[%s302 + $0x18] sm:$0xff] %v919
        %v924 = vlog2.pop %v916
        %v925 = vmul.f32 %v924, 0.6931472
        %v926 = vlog2.pop %v917
        %v927 = vmul.f32 %v926, 0.6931472
        %v928 = vlog2.pop %v918
        %v929 = vmul.f32 %v928, 0.6931472
        %v930 = vlog2.pop %v919
        %v931 = vmul.f32 %v930, 0.6931472
        %v932 = vmax.f32 %v925, -100.0
        %v933 = vmax.f32 %v927, -100.0
        %v934 = vmax.f32 %v929, -100.0
        %v935 = vmax.f32 %v931, -100.0
        %v936 = vsub.f32 1.0, %v916
        %v937 = vsub.f32 1.0, %v917
        %v938 = vsub.f32 1.0, %v918
        %v939 = vsub.f32 1.0, %v919
        %v940 = vlog2.pop %v936
        %v941 = vmul.f32 %v940, 0.6931472
        %v942 = vlog2.pop %v937
        %v943 = vmul.f32 %v942, 0.6931472
        %v944 = vlog2.pop %v938
        %v945 = vmul.f32 %v944, 0.6931472
        %v946 = vlog2.pop %v939
        %v947 = vmul.f32 %v946, 0.6931472
        %v948 = vmax.f32 %v941, -100.0
        %v949 = vmax.f32 %v943, -100.0
        %v950 = vmax.f32 %v945, -100.0
        %v951 = vmax.f32 %v947, -100.0
        %v952 = vmul.f32 %v311, %v932
        %v953 = vmul.f32 %v312, %v933
        %v954 = vmul.f32 %v313, %v934
        %v955 = vmul.f32 %v314, %v935
        %v956 = vsub.f32 1.0, %v311
        %v957 = vsub.f32 1.0, %v312
        %v958 = vsub.f32 1.0, %v313
        %v959 = vsub.f32 1.0, %v314
        %v960 = vmul.f32 %v956, %v948
        %v961 = vmul.f32 %v957, %v949
        %v962 = vmul.f32 %v958, %v950
        %v963 = vmul.f32 %v959, %v951
        %v964 = vadd.f32 %v952, %v960
        %v965 = vadd.f32 %v953, %v961
        %v966 = vadd.f32 %v954, %v962
        %v967 = vadd.f32 %v955, %v963
        %v968 = vadd.f32 %v964, %v965
        %v969 = vadd.f32 %v968, %v966
        %v970 = vadd.f32 %v969, %v967
        %v971 = vrot.slane %v970, 4
        %v972 = vadd.f32 %v970, %v971
        %v973 = vrot.slane %v972, 2
        %v974 = vadd.f32 %v972, %v973
        %v975 = vrot.slane %v974, 1
        %v976 = vadd.f32 %v974, %v975
        %v977 = vsub.f32 0.0, %v976
        %v978 = vmul.f32 %v621, %v621
        %v979 = vmul.f32 %v623, %v623
        %v980 = vmul.f32 %v607, %v607
        %v981 = vmul.f32 %v610, %v610
        %v982 = vadd.f32 %v978, %v980
        %v983 = vadd.f32 %v979, %v981
        %v984 = vsub.f32 %v982, 1.0
        %v985 = vsub.f32 %v983, 1.0
        %v986 = vsub.f32 %v984, %v613
        %v987 = vsub.f32 %v985, %v616
        %v988 = vadd.f32 %v986, %v987
        %v989 = vrot.slane %v988, 4
        %v990 = vadd.f32 %v988, %v989
        %v991 = vrot.slane %v990, 2
        %v992 = vadd.f32 %v990, %v991
        %v993 = vrot.slane %v992, 1
        %v994 = vadd.f32 %v992, %v993
        %v995 = vmul.f32 %v994, 0.5
        %v996 = vadd.f32 %v977, %v995
        %997 = vst [vmem:[%s310] sm:$0x1] %v996
        %s998 = sand.u32 %s100, 1
        %s999 = scalar_lea.sflag [#allocation5], %s998
        %s1000 = sand.u32 %s100, 1
        %s1001 = smul.addr %s1000, 32
        %s1002 = scalar_lea.vmem [#allocation4], %s1001
        %p1003 = scmp.lt.s32.totalorder %s19, 1
        %s1004 = scalar_select %p1003, %s19, 1
        %s1005 = scalar_lea.vmem %s4, %s1004
        // Predicated region
        $region109: #{vae_forward.1} parent=99 // pred_check
          %p1006 = pneg %p110
        $region110: #{vae_forward.1} parent=99 // pred_check_branch
          %1008 = sbr.rel (%p1006) target = $region112
        $region111: #{vae_forward.1} parent=99 // pred_region
          %1010 = vsyncadd %s999, 0
          %s1011 = smul.addr %s19, 8
          %s1012 = scalar_lea.hbm %s3, %s1011
          %s1013 = sshll.u32 %s1002, 4
          %s1014 = int_to_ptr.vmem [resolvable:$true] %s1013
          %s1015 = sshll.u32 %s1012, 4
          %s1016 = int_to_ptr.hbm [resolvable:$true] %s1015
          %1021 = dma.vmem_to_hbm [thread:$0]  %s1014, 512, %s1016, %s999, 128, 256, 8
        $region112: #{vae_forward.1} parent=99 // pred_fallthru
          _
        // Predicated region
        $region113: #{vae_forward.1} parent=99 // pred_check
          %p1022 = pneg %p136
        $region114: #{vae_forward.1} parent=99 // pred_check_branch
          %1024 = sbr.rel (%p1022) target = $region116
        $region115: #{vae_forward.1} parent=99 // pred_region
          _
        $region116: #{vae_forward.1} parent=99 // pred_fallthru
          _
      $region100: #{vae_forward.1} parent=5 // pred_fallthru
        _
      %p1025 = scmp.le.s32.totalorder 2, %s14
      // Predicated region
      $region117: #{vae_forward.1} parent=5 // pred_check
        %p1026 = pneg %p1025
      $region118: #{vae_forward.1} parent=5 // pred_check_branch
        %1028 = sbr.rel (%p1026) target = $region120
      $region119: #{vae_forward.1} parent=5 // pred_region
        %s1029 = ssub.s32 %s14, 2
        // Predicated region
        $region121: #{vae_forward.1} parent=119 // pred_check
          %p1030 = pneg %p116
        $region122: #{vae_forward.1} parent=119 // pred_check_branch
          %1032 = sbr.rel (%p1030) target = $region124
        $region123: #{vae_forward.1} parent=119 // pred_region
          %s1033 = sand.u32 %s101, 1
          %s1034 = scalar_lea.sflag [#allocation5], %s1033
          %s1035 = sand.u32 %s101, 1
          %s1036 = smul.addr %s1035, 32
          %s1037 = scalar_lea.vmem [#allocation4], %s1036
          %1039 = dma.done %s1034, 512
        $region124: #{vae_forward.1} parent=119 // pred_fallthru
          _
        // Predicated region
        $region125: #{vae_forward.1} parent=119 // pred_check
          %p1040 = pneg %p142
        $region126: #{vae_forward.1} parent=119 // pred_check_branch
          %1042 = sbr.rel (%p1040) target = $region128
        $region127: #{vae_forward.1} parent=119 // pred_region
          %p1043 = scmp.lt.s32.totalorder %s20, 1
          %s1044 = scalar_select %p1043, %s20, 1
          %s1045 = scalar_lea.vmem %s4, %s1044
        $region128: #{vae_forward.1} parent=119 // pred_fallthru
          _
      $region120: #{vae_forward.1} parent=5 // pred_fallthru
        _
    $region6: #{vae_forward.1} parent=1 // loop_footer
      %s18 = sadd.s32 1, %s14
    $region7: #{vae_forward.1} parent=1 // loop_footer_branch
      %13 = sbr.rel target = $region3
    $region8: #{vae_forward.1} parent=1 // loop_exit
      _
    %1046 = vsyncpa [#allocation5], 1
    %s1047 = scalar_lea.sflag [#allocation5], 1
    %1048 = vsyncpa %s1047, 1

</llo_original>
